<compile_context>
chip_gen: v7x
topology: tpu7x:2x2x1
jax: 0.10.0
libtpu: 0.0.40
codegen_flags: <defaults>
</compile_context>

<pallas_src>
import jax
import jax.numpy as jnp
from jax.experimental import pallas as pl
from jax.experimental.pallas import tpu as pltpu

_LANES = 512          # lane-dense last dim (multiple of 128)
_TM_MAX = 1024        # max rows per block -> 1024*512*4B = 2 MiB / block (f32)


def _dequant_kernel(params_ref, x_ref, o_ref):
    # params_ref: SMEM (2,) = [scale, bias] with bias = -zero_point * scale
    # y = (x - zp) * sc  ==  x * sc + bias
    sc = params_ref[0]
    bias = params_ref[1]
    o_ref[...] = x_ref[...] * sc + bias


def _to_lane_dense_2d(x):
    """Flatten x and view it as (rows, _LANES) with rows a multiple of the
    chosen row-tile. Pads with zeros if needed; returns (x2d, tm, total)."""
    total = x.size
    flat = x.reshape(-1)

    rows = -(-total // _LANES)                 # ceil(total / LANES)
    tm = min(_TM_MAX, max(rows, 1))
    rows_padded = -(-rows // tm) * tm          # ceil to multiple of tm
    padded_total = rows_padded * _LANES

    if padded_total != total:
        flat = jnp.pad(flat, (0, padded_total - total))
    return flat.reshape(rows_padded, _LANES), tm, total


def input_preprocessing(x, scale=None, zero_point=None, *, is_onnx_export=False):
    """JAX/Pallas equivalent of _InputPreprocessingModule.forward.

    x: float32 NCHW (or any-shape) array.
    scale, zero_point: per-tensor scalars (or None), mirroring the module's
    registered buffers.
    """
    if not is_onnx_export:
        # Eager forward is a pure identity -- no kernel, no HBM round-trip.
        return x

    # Export path: (x - zero_point) * scale.  Missing scale -> 1.0, missing
    # zero_point -> 0.0 (matching the symbolic graph skipping that op).
    sc = jnp.float32(1.0) if scale is None else jnp.asarray(scale, jnp.float32)
    zp = jnp.float32(0.0) if zero_point is None else jnp.asarray(zero_point, jnp.float32)
    params = jnp.stack([sc, -zp * sc]).astype(jnp.float32)   # [scale, bias]

    orig_shape = x.shape
    x2d, tm, total = _to_lane_dense_2d(x)
    rows_padded, lanes = x2d.shape
    grid = (rows_padded // tm,)

    out2d = pl.pallas_call(
        _dequant_kernel,
        out_shape=jax.ShapeDtypeStruct((rows_padded, lanes), x2d.dtype),
        grid=grid,
        in_specs=[
            pl.BlockSpec(memory_space=pltpu.SMEM),            # (scale, bias)
            pl.BlockSpec((tm, lanes), lambda i: (i, 0)),      # x tile
        ],
        out_specs=pl.BlockSpec((tm, lanes), lambda i: (i, 0)),
        compiler_params=pltpu.CompilerParams(
            dimension_semantics=("parallel",),
            vmem_limit_bytes=32 * 1024 * 1024,
        ),
        cost_estimate=pl.CostEstimate(
            flops=2 * total,
            transcendentals=0,
            bytes_accessed=2 * x.nbytes,
        ),
    )(params, x2d)

    return out2d.reshape(-1)[:total].reshape(orig_shape)


if __name__ == "__main__":
    key = jax.random.PRNGKey(0)

    # Deterministic "buffers" (per-tensor quant params), as registered in __init__.
    scale = jnp.float32(0.0625)
    zero_point = jnp.float32(3.0)

    # Small NCHW input consistent with a quantized-conv-style front end.
    x = jax.random.normal(key, (2, 4, 16, 16), dtype=jnp.float32)

    # Eager forward: identity (no kernel launched).
    y_eager = input_preprocessing(x, scale, zero_point, is_onnx_export=False)
    y_eager = jax.block_until_ready(y_eager)
    assert jnp.allclose(y_eager, x), "eager path must be identity"

    # ONNX-export symbolic path: (x - zero_point) * scale.
    y_export = input_preprocessing(x, scale, zero_point, is_onnx_export=True)
    y_export = jax.block_until_ready(y_export)
    ref = (x - zero_point) * scale
    assert jnp.allclose(y_export, ref, atol=1e-6, rtol=1e-6), "export path mismatch"

    # Non-128-aligned spatial size (7x7 feature map) exercises the padding path.
    x2 = jax.random.normal(jax.random.PRNGKey(1), (1, 3, 7, 7), dtype=jnp.float32)
    y2 = input_preprocessing(x2, scale, zero_point, is_onnx_export=True)
    y2 = jax.block_until_ready(y2)
    ref2 = (x2 - zero_point) * scale
    assert jnp.allclose(y2, ref2, atol=1e-6, rtol=1e-6), "padded export path mismatch"

    # Missing scale / zero_point (None buffers) -> only the present ops apply.
    y3 = input_preprocessing(x, None, zero_point, is_onnx_export=True)
    y3 = jax.block_until_ready(y3)
    assert jnp.allclose(y3, x - zero_point, atol=1e-6, rtol=1e-6), "None-scale mismatch"

    print("KERNEL_OK")
</pallas_src>

<mosaic_0001>
module attributes {stable_mosaic.version = 11 : i64} {
  func.func @_dequant_kernel(%arg0: i32, %arg1: memref<2xf32, #tpu.memory_space<smem>>, %arg2: memref<4x512xf32, #tpu.memory_space<vmem>>, %arg3: memref<4x512xf32, #tpu.memory_space<vmem>>) attributes {dimension_semantics = [#tpu.dimension_semantics<parallel>], iteration_bounds = array<i64: 1>, scalar_prefetch = 0 : i64, scratch_operands = 0 : i64, tpu.core_type = #tpu.core_type<tc>, window_params = [{transform_indices = @transform_0, window_bounds = array<i64: 2>}, {transform_indices = @transform_1, window_bounds = array<i64: 4, 512>}, {transform_indices = @transform_2, window_bounds = array<i64: 4, 512>}]} {
    %c0 = arith.constant 0 : index
    %0 = memref.load %arg1[%c0] : memref<2xf32, #tpu.memory_space<smem>>
    %c1 = arith.constant 1 : index
    %1 = memref.load %arg1[%c1] : memref<2xf32, #tpu.memory_space<smem>>
    %c0_0 = arith.constant 0 : index
    %c0_1 = arith.constant 0 : index
    %2 = vector.load %arg2[%c0_0, %c0_1] : memref<4x512xf32, #tpu.memory_space<vmem>>, vector<4x512xf32>
    %3 = vector.broadcast %0 : f32 to vector<4x512xf32>
    %4 = arith.mulf %2, %3 : vector<4x512xf32>
    %5 = vector.broadcast %1 : f32 to vector<4x512xf32>
    %6 = arith.addf %4, %5 : vector<4x512xf32>
    %c0_2 = arith.constant 0 : index
    %c0_3 = arith.constant 0 : index
    %7 = vector.load %arg3[%c0_2, %c0_3] : memref<4x512xf32, #tpu.memory_space<vmem>>, vector<4x512xf32>
    tpu.vector_store %arg3[%c0_2, %c0_3], %6 {strides = array<i32>} : memref<4x512xf32, #tpu.memory_space<vmem>>, vector<4x512xf32>,
    return
  }
  func.func @transform_0(%arg0: i32) -> i32 {
    %c0_i32 = arith.constant 0 : i32
    %c0_i32_0 = arith.constant 0 : i32
    return %c0_i32 : i32
  }
  func.func @transform_1(%arg0: i32) -> (i32, i32) {
    %c0_i32 = arith.constant 0 : i32
    %c0_i32_0 = arith.constant 0 : i32
    return %arg0, %c0_i32 : i32, i32
  }
  func.func @transform_2(%arg0: i32) -> (i32, i32) {
    %c0_i32 = arith.constant 0 : i32
    %c0_i32_0 = arith.constant 0 : i32
    return %arg0, %c0_i32 : i32, i32
  }
}

</mosaic_0001>

<llo_original>
// kernel: tpu_custom_call.1
$region0: #{tpu_custom_call.1}
  #allocation0 [shape = 'u32[]', space=smem, size = 0x4, offset = 0x4, fixed_abs, tag = 'smem constant byte address 0x4 - core index']
  #allocation1 [shape = 'u32[144,128]{1,0:T(1,128)}', space=vmem, size = 0x12000, scoped, tag = 'internal scratch']
  %s0 = inlined_call_operand.hbm [shape: f32[2], index: 0, kind: input, shape index: {}]
  %s1 = inlined_call_operand.hbm [shape: f32[4,512], index: 1, kind: input, shape index: {}]
  %s2 = inlined_call_operand.hbm [shape: f32[4,512], index: 2, kind: output, shape index: {}]
  %s3 = sld [smem:[#allocation0]]
  $region26: #{tpu_custom_call.1} parent=0
    _
  %s5 = ssub.s32 1, %s3
  %s6 = scalar_select 0, %s5, %s3
  $region1: #{tpu_custom_call.1} parent=0
    #allocation2 [shape = 'u8[512]{0}', space=smem, size = 0x200, scoped, tag = 'input window, operand 0, single buffered']
    #allocation3 [shape = 's32[1]{0}', space=sflag, size = 0x4, scoped, tag = 'scoped memory for tpu_custom_call.1']
    #allocation4 [shape = 's32[1]{0}', space=sflag, size = 0x4, scoped, tag = 'scoped memory for tpu_custom_call.1']
    #allocation5 [shape = 's32[1]{0}', space=sflag, size = 0x4, scoped, tag = 'scoped memory for tpu_custom_call.1']
    #allocation6 [shape = 'u8[8192]{0}', space=vmem, size = 0x2000, scoped, tag = 'input window, operand 1, single buffered']
    #allocation7 [shape = 'u8[8192]{0}', space=vmem, size = 0x2000, scoped, tag = 'output window, operand 0, single buffered']
    %7 = vsyncpa [#allocation5], 0
    %8 = vsyncpa [#allocation3], 0
    %9 = vsyncpa [#allocation4], 0
    // Predicated region
    $region2: #{tpu_custom_call.1} parent=1 // pred_check
      _
    $region3: #{tpu_custom_call.1} parent=1 // pred_check_branch
      %11 = sbr.rel (0) target = $region5
    $region4: #{tpu_custom_call.1} parent=1 // pred_region
      %s13 = ssub.s32 16, 16
      %14 = vsyncadd [#allocation5], %s13
      %17 = dma.hbm_to_smem %s0, 16, [#allocation2], [#allocation5]
    $region5: #{tpu_custom_call.1} parent=1 // pred_fallthru
      _
    // Predicated region
    $region6: #{tpu_custom_call.1} parent=1 // pred_check
      _
    $region7: #{tpu_custom_call.1} parent=1 // pred_check_branch
      %19 = sbr.rel (0) target = $region9
    $region8: #{tpu_custom_call.1} parent=1 // pred_region
      %s21 = ssub.s32 256, 256
      %22 = vsyncadd [#allocation3], %s21
      %s24 = sshll.u32 [#allocation6], 4
      %s25 = int_to_ptr.vmem [resolvable:$true] %s24
      %27 = dma.hbm_to_vmem [thread:$0]  %s1, 256, %s25, [#allocation3]
    $region9: #{tpu_custom_call.1} parent=1 // pred_fallthru
      _
    // Predicated region
    $region10: #{tpu_custom_call.1} parent=1 // pred_check
      _
    $region11: #{tpu_custom_call.1} parent=1 // pred_check_branch
      %29 = sbr.rel (0) target = $region13
    $region12: #{tpu_custom_call.1} parent=1 // pred_region
      %30 = dma.done [#allocation5], 16
    $region13: #{tpu_custom_call.1} parent=1 // pred_fallthru
      _
    // Predicated region
    $region14: #{tpu_custom_call.1} parent=1 // pred_check
      _
    $region15: #{tpu_custom_call.1} parent=1 // pred_check_branch
      %32 = sbr.rel (0) target = $region17
    $region16: #{tpu_custom_call.1} parent=1 // pred_region
      %33 = dma.done [#allocation3], 256
    $region17: #{tpu_custom_call.1} parent=1 // pred_fallthru
      _
    %34 = sfence
    %s35 = sld [smem:[#allocation2]]
    %s36 = sld [smem:[#allocation2 + $0x1]]
    %v37 = vld [vmem:[#allocation6] sm:$0xff]
    %v38 = vld [vmem:[#allocation6 + $0x8] sm:$0xff]
    %v39 = vstv %s35
    %v40 = vmul.f32 %v37, %v39
    %v41 = vmul.f32 %v38, %v39
    %v42 = vstv %s36
    %v43 = vadd.f32 %v40, %v42
    %v44 = vadd.f32 %v41, %v42
    %45 = vst [vmem:[#allocation7] sm:$0xff] %v43
    %46 = vst [vmem:[#allocation7 + $0x8] sm:$0xff] %v44
    // Predicated region
    $region18: #{tpu_custom_call.1} parent=1 // pred_check
      _
    $region19: #{tpu_custom_call.1} parent=1 // pred_check_branch
      %48 = sbr.rel (0) target = $region21
    $region20: #{tpu_custom_call.1} parent=1 // pred_region
      %s50 = ssub.s32 256, 256
      %51 = vsyncadd [#allocation4], %s50
      %s53 = sshll.u32 [#allocation7], 4
      %s54 = int_to_ptr.vmem [resolvable:$true] %s53
      %56 = dma.vmem_to_hbm [thread:$0]  %s54, 256, %s2, [#allocation4]
    $region21: #{tpu_custom_call.1} parent=1 // pred_fallthru
      _
    // Predicated region
    $region22: #{tpu_custom_call.1} parent=1 // pred_check
      _
    $region23: #{tpu_custom_call.1} parent=1 // pred_check_branch
      %58 = sbr.rel (0) target = $region25
    $region24: #{tpu_custom_call.1} parent=1 // pred_region
      %59 = dma.done [#allocation4], 256
    $region25: #{tpu_custom_call.1} parent=1 // pred_fallthru
      _
    %60 = vsyncpa [#allocation3], 1
    %61 = vsyncpa [#allocation4], 1
    %62 = vsyncpa [#allocation5], 1

</llo_original>
